<compile_context>
chip_gen: v7x
topology: tpu7x:2x2x1
jax: 0.10.0
libtpu: 0.0.40
codegen_flags: <defaults>
</compile_context>

<pallas_src>
import functools

import jax
import jax.numpy as jnp
from jax import lax
from jax.experimental import pallas as pl
from jax.experimental.pallas import tpu as pltpu


def _round_up(x, m):
    return ((x + m - 1) // m) * m


def _matmul_pool_kernel(x_ref, w_ref, b_ref, o_ref, mx_ref, *, l_out, needs_mask):
    """One (batch-tile, time-tile) step: im2col matmul + running max-pool.

    x_ref : (TB, TL, KC)  bf16  lane-dense im2col activation tile (KC = K*C)
    w_ref : (KC, O_pad)   bf16  fused conv weights (im2col layout)
    b_ref : (1, O_pad)    f32   fused bias
    o_ref : (TB, O_pad)   f32   pooled output (written on the last time step)
    mx_ref: (TB, O_pad)   f32   running-max accumulator (VMEM scratch)
    """
    li = pl.program_id(1)
    TB, TL, KC = x_ref.shape
    O_pad = w_ref.shape[1]

    @pl.when(li == 0)
    def _():
        mx_ref[...] = jnp.full_like(mx_ref, -jnp.inf)

    # Pure MXU matmul: single KC-deep contraction, f32 accumulation.
    # TB and TL are both multiples of 8, so this reshape is layout-free.
    x = x_ref[...].reshape(TB * TL, KC)
    acc = jnp.dot(x, w_ref[...], preferred_element_type=jnp.float32)
    acc = acc.reshape(TB, TL, O_pad)

    if needs_mask:
        # Padded time positions (t >= l_out) must never win the max -> -inf.
        t_idx = li * TL + lax.broadcasted_iota(jnp.int32, (1, TL, 1), 1)
        acc = jnp.where(t_idx < l_out, acc, -jnp.inf)

    mx_ref[...] = jnp.maximum(mx_ref[...], jnp.max(acc, axis=1))

    @pl.when(li == pl.num_programs(1) - 1)
    def _():
        # Bias + ReLU hoisted AFTER the max (bias is time-invariant and ReLU is
        # monotone, so max(relu(conv + b)) == relu(max(conv) + b)).
        o_ref[...] = jnp.maximum(mx_ref[...] + b_ref[...], 0.0).astype(o_ref.dtype)


def _fused_conv_pool(x_blc_bf16, w_flat, b_row, kernel_size):
    """x: (B, L, C) bf16; w_flat: (K*C, O_pad) bf16; b_row: (1, O_pad) f32."""
    B, L, C = x_blc_bf16.shape
    KC, O_pad = w_flat.shape
    K = kernel_size
    l_out = L - K + 1
    if l_out < 1:
        raise ValueError("sequence length must be >= kernel_size")

    # ---- tile selection ---------------------------------------------------
    # Always pad B to a sublane multiple of 8; fat batch tiles up to 64 rows.
    TB = min(64, _round_up(B, 8))
    B_pad = _round_up(B, TB)
    # Time tile sized so the x block is ~512 KB (amortizes per-step overhead).
    tl_target = max(8, (512 * 1024 // (TB * KC * 2)) // 8 * 8)
    TL = min(tl_target, _round_up(l_out, 8))
    L_pad = _round_up(l_out, TL)
    needs_mask = (L_pad != l_out)

    # ---- wrapper-side im2col (lane-dense KC = K*C) --------------------------
    # Column index k*C + c matches the weight packing below.
    # TODO(synk): for very long L this costs K x HBM traffic on x; switch to an
    # in-kernel per-tap accumulation (unrolled fori_loop over K, no materialized
    # im2col) in that regime.
    cols = [x_blc_bf16[:, k:k + l_out, :] for k in range(K)]
    x_unf = jnp.concatenate(cols, axis=-1)                      # (B, l_out, K*C)
    x_unf = jnp.pad(x_unf, ((0, B_pad - B), (0, L_pad - l_out), (0, 0)))

    nb, nl = B_pad // TB, L_pad // TL

    # Explicit scoped-VMEM budget (double-buffered x/out + resident w/b + scratch).
    vmem_need = (2 * TB * TL * KC * 2 + 2 * KC * O_pad * 2 + 2 * O_pad * 4
                 + 3 * TB * O_pad * 4)
    vmem_limit = int(min(64 * 1024 * 1024, max(16 * 1024 * 1024, 4 * vmem_need)))

    kernel = functools.partial(_matmul_pool_kernel, l_out=l_out,
                               needs_mask=needs_mask)
    out = pl.pallas_call(
        kernel,
        out_shape=jax.ShapeDtypeStruct((B_pad, O_pad), jnp.float32),
        grid=(nb, nl),
        in_specs=[
            pl.BlockSpec((TB, TL, KC), lambda i, l: (i, l, 0)),
            # Constant index maps -> blocks stay resident, no re-DMA per step.
            pl.BlockSpec((KC, O_pad), lambda i, l: (0, 0)),
            pl.BlockSpec((1, O_pad), lambda i, l: (0, 0)),
        ],
        out_specs=pl.BlockSpec((TB, O_pad), lambda i, l: (i, 0)),
        scratch_shapes=[pltpu.VMEM((TB, O_pad), jnp.float32)],
        compiler_params=pltpu.CompilerParams(
            dimension_semantics=("parallel", "arbitrary"),
            vmem_limit_bytes=vmem_limit),
    )(x_unf, w_flat, b_row)
    return out[:B]


class CNNPallas:
    """JAX/Pallas equivalent of the PyTorch CNN module (forward pass)."""

    def __init__(self, embed_dim=32, num_filters=(16, 16, 16),
                 kernel_sizes=(8, 8, 8), key=None):
        self.embed_dim = embed_dim
        self.num_filters = list(num_filters)
        self.kernel_sizes = list(kernel_sizes)
        if key is None:
            key = jax.random.PRNGKey(0)

        # PyTorch Conv1d parameter layout: weight (O, C, K), bias (O,).
        self.weights = []
        self.biases = []
        for nf, ks in zip(self.num_filters, self.kernel_sizes):
            kw, kb, key = jax.random.split(key, 3)
            fan_in = embed_dim * ks
            bound = 1.0 / float(fan_in) ** 0.5
            w = jax.random.uniform(kw, (nf, embed_dim, ks),
                                   minval=-bound, maxval=bound, dtype=jnp.float32)
            b = jax.random.uniform(kb, (nf,),
                                   minval=-bound, maxval=bound, dtype=jnp.float32)
            self.weights.append(w)
            self.biases.append(b)

        # Repack weights once (not per forward call).
        if len(set(self.kernel_sizes)) == 1:
            # All branches share K -> fuse into a single lane-dense slab so x is
            # DMA'd once and the MXU N dimension is as full as the filter count
            # allows (e.g. 300 filters -> O_pad=384 fills v6e/v7x's 256-wide MXU).
            self._groups = [self._pack_group(self.weights, self.biases,
                                             self.kernel_sizes[0])]
        else:
            # TODO(synk): branches with differing kernel sizes are not fused into
            # one matmul (different valid output lengths); each gets its own call.
            self._groups = [self._pack_group([w], [b], ks)
                            for w, b, ks in zip(self.weights, self.biases,
                                                self.kernel_sizes)]

    def _pack_group(self, ws, bs, ks):
        w_all = jnp.concatenate(ws, axis=0)                   # (O_total, C, K)
        b_all = jnp.concatenate(bs, axis=0)                   # (O_total,)
        o_total, C, K = w_all.shape
        # im2col layout: row index = k*C + c  ->  transpose (O,C,K) -> (K,C,O).
        w_flat = jnp.transpose(w_all, (2, 1, 0)).reshape(K * C, o_total)
        o_pad = _round_up(o_total, 128)                       # lane-dense stores
        pad = o_pad - o_total
        w_flat = jnp.pad(w_flat, ((0, 0), (0, pad))).astype(jnp.bfloat16)
        b_row = jnp.pad(b_all, (0, pad)).astype(jnp.float32)[None, :]
        return (K, w_flat, b_row, o_total)

    def __call__(self, x):
        # x: (B, C=embed_dim, L)  -- PyTorch NCL layout.
        x_blc = jnp.transpose(x, (0, 2, 1)).astype(jnp.bfloat16)   # (B, L, C)
        outs = []
        for K, w_flat, b_row, o_total in self._groups:
            y = _fused_conv_pool(x_blc, w_flat, b_row, K)          # (B, O_pad)
            outs.append(y[:, :o_total])
        if len(outs) == 1:
            return outs[0]
        return jnp.concatenate(outs, axis=1)


def _reference(x, model):
    """Pure-JAX f32 reference (lax.conv) for correctness checking."""
    outs = []
    for w, b in zip(model.weights, model.biases):
        y = lax.conv_general_dilated(
            x.astype(jnp.float32), w.astype(jnp.float32),
            window_strides=(1,), padding="VALID",
            dimension_numbers=("NCH", "OIH", "NCH"))
        y = y + b[None, :, None]
        y = jnp.maximum(y, 0.0)
        outs.append(jnp.max(y, axis=2))
    return jnp.concatenate(outs, axis=1)


if __name__ == "__main__":
    key = jax.random.PRNGKey(0)
    kx, kp = jax.random.split(key)

    # Small shapes consistent with the module's forward pass.
    B, C, L = 2, 32, 24                       # embed_dim=32, seq_len=24
    model = CNNPallas(embed_dim=C,
                      num_filters=(16, 16, 16),
                      kernel_sizes=(8, 8, 8),
                      key=kp)

    x = jax.random.normal(kx, (B, C, L), dtype=jnp.float32)

    y = jax.block_until_ready(model(x))
    y_ref = jax.block_until_ready(_reference(x, model))

    assert y.shape == (B, sum(model.num_filters)), y.shape
    # bf16 MXU feed with f32 accumulation -> slightly looser tolerance.
    assert jnp.allclose(y, y_ref, atol=2e-2, rtol=2e-2), "mismatch vs JAX reference"

    print("KERNEL_OK")
</pallas_src>

<mosaic_0001>
module attributes {stable_mosaic.version = 11 : i64} {
  func.func @_matmul_pool_kernel(%arg0: i32, %arg1: i32, %arg2: memref<8x24x256xbf16, #tpu.memory_space<vmem>>, %arg3: memref<256x128xbf16, #tpu.memory_space<vmem>>, %arg4: memref<1x128xf32, #tpu.memory_space<vmem>>, %arg5: memref<8x128xf32, #tpu.memory_space<vmem>>, %arg6: memref<8x128xf32, #tpu.memory_space<vmem>>) attributes {dimension_semantics = [#tpu.dimension_semantics<parallel>, #tpu.dimension_semantics<arbitrary>], iteration_bounds = array<i64: 1, 1>, scalar_prefetch = 0 : i64, scratch_operands = 1 : i64, tpu.core_type = #tpu.core_type<tc>, window_params = [{transform_indices = @transform_0, window_bounds = array<i64: 8, 24, 256>}, {pipeline_mode = #tpu.pipeline_mode<synchronous>, transform_indices = @transform_1, window_bounds = array<i64: 256, 128>}, {pipeline_mode = #tpu.pipeline_mode<synchronous>, transform_indices = @transform_2, window_bounds = array<i64: 1, 128>}, {transform_indices = @transform_3, window_bounds = array<i64: 8, 128>}]} {
    %c0_i32 = arith.constant 0 : i32
    %0 = arith.cmpi eq, %arg1, %c0_i32 : i32
    %1 = arith.extui %0 : i1 to i32
    %c0_i32_0 = arith.constant 0 : i32
    %2 = arith.cmpi ne, %1, %c0_i32_0 : i32
    scf.if %2 {
      %cst_13 = arith.constant 0xFF800000 : f32
      %25 = vector.broadcast %cst_13 : f32 to vector<8x128xf32>
      %c0_14 = arith.constant 0 : index
      %c0_15 = arith.constant 0 : index
      %26 = vector.load %arg6[%c0_14, %c0_15] : memref<8x128xf32, #tpu.memory_space<vmem>>, vector<8x128xf32>
      tpu.vector_store %arg6[%c0_14, %c0_15], %25 {strides = array<i32>} : memref<8x128xf32, #tpu.memory_space<vmem>>, vector<8x128xf32>,
    } else {
    }
    %c0 = arith.constant 0 : index
    %c0_1 = arith.constant 0 : index
    %c0_2 = arith.constant 0 : index
    %3 = vector.load %arg2[%c0, %c0_1, %c0_2] : memref<8x24x256xbf16, #tpu.memory_space<vmem>>, vector<8x24x256xbf16>
    %4 = vector.shape_cast %3 : vector<8x24x256xbf16> to vector<192x256xbf16>
    %c0_3 = arith.constant 0 : index
    %c0_4 = arith.constant 0 : index
    %5 = vector.load %arg3[%c0_3, %c0_4] : memref<256x128xbf16, #tpu.memory_space<vmem>>, vector<256x128xbf16>
    %cst = arith.constant dense<0.000000e+00> : vector<192x128xf32>
    %6 = tpu.matmul %4, %5, %cst {dimension_numbers = #tpu.dot_dimension_numbers<[1], [0], [0], [1], [0, 0, 1, 1], [], []>} : vector<192x256xbf16>, vector<256x128xbf16>, vector<192x128xf32> -> vector<192x128xf32>
    %7 = vector.shape_cast %6 : vector<192x128xf32> to vector<8x24x128xf32>
    %c24_i32 = arith.constant 24 : i32
    %8 = arith.muli %arg1, %c24_i32 : i32
    %9 = tpu.iota {dimensions = array<i32: 1>} : vector<1x24x1xi32>
    %10 = vector.broadcast %8 : i32 to vector<1x24x1xi32>
    %11 = arith.addi %10, %9 : vector<1x24x1xi32>
    %c17_i32 = arith.constant 17 : i32
    %12 = vector.broadcast %c17_i32 : i32 to vector<1x24x1xi32>
    %13 = arith.cmpi slt, %11, %12 : vector<1x24x1xi32>
    %cst_5 = arith.constant 0xFF800000 : f32
    %14 = vector.shape_cast %13 : vector<1x24x1xi1> to vector<1x24x1xi1>
    %15 = vector.broadcast %14 : vector<1x24x1xi1> to vector<8x24x128xi1>
    %16 = vector.broadcast %cst_5 : f32 to vector<8x24x128xf32>
    %17 = arith.select %15, %7, %16 : vector<8x24x128xi1>, vector<8x24x128xf32>
    %c0_6 = arith.constant 0 : index
    %c0_7 = arith.constant 0 : index
    %18 = vector.load %arg6[%c0_6, %c0_7] : memref<8x128xf32, #tpu.memory_space<vmem>>, vector<8x128xf32>
    %cst_8 = arith.constant dense<0xFF800000> : vector<8x128xf32>
    %19 = vector.multi_reduction <maximumf>, %17, %cst_8 [1] : vector<8x24x128xf32> to vector<8x128xf32>
    %20 = arith.maximumf %18, %19 : vector<8x128xf32>
    %c0_9 = arith.constant 0 : index
    %c0_10 = arith.constant 0 : index
    %21 = vector.load %arg6[%c0_9, %c0_10] : memref<8x128xf32, #tpu.memory_space<vmem>>, vector<8x128xf32>
    tpu.vector_store %arg6[%c0_9, %c0_10], %20 {strides = array<i32>} : memref<8x128xf32, #tpu.memory_space<vmem>>, vector<8x128xf32>,
    %c0_i32_11 = arith.constant 0 : i32
    %22 = arith.cmpi eq, %arg1, %c0_i32_11 : i32
    %23 = arith.extui %22 : i1 to i32
    %c0_i32_12 = arith.constant 0 : i32
    %24 = arith.cmpi ne, %23, %c0_i32_12 : i32
    scf.if %24 {
      %c0_13 = arith.constant 0 : index
      %c0_14 = arith.constant 0 : index
      %25 = vector.load %arg6[%c0_13, %c0_14] : memref<8x128xf32, #tpu.memory_space<vmem>>, vector<8x128xf32>
      %c0_15 = arith.constant 0 : index
      %c0_16 = arith.constant 0 : index
      %26 = vector.load %arg4[%c0_15, %c0_16] : memref<1x128xf32, #tpu.memory_space<vmem>>, vector<1x128xf32>
      %27 = vector.broadcast %26 : vector<1x128xf32> to vector<8x128xf32>
      %28 = arith.addf %25, %27 : vector<8x128xf32>
      %cst_17 = arith.constant 0.000000e+00 : f32
      %29 = vector.broadcast %cst_17 : f32 to vector<8x128xf32>
      %30 = arith.maximumf %28, %29 : vector<8x128xf32>
      %c0_18 = arith.constant 0 : index
      %c0_19 = arith.constant 0 : index
      %31 = vector.load %arg5[%c0_18, %c0_19] : memref<8x128xf32, #tpu.memory_space<vmem>>, vector<8x128xf32>
      tpu.vector_store %arg5[%c0_18, %c0_19], %30 {strides = array<i32>} : memref<8x128xf32, #tpu.memory_space<vmem>>, vector<8x128xf32>,
    } else {
    }
    return
  }
  func.func @transform_0(%arg0: i32, %arg1: i32) -> (i32, i32, i32) {
    %c0_i32 = arith.constant 0 : i32
    %c0_i32_0 = arith.constant 0 : i32
    return %arg0, %arg1, %c0_i32 : i32, i32, i32
  }
  func.func @transform_1(%arg0: i32, %arg1: i32) -> (i32, i32) {
    %c0_i32 = arith.constant 0 : i32
    %c0_i32_0 = arith.constant 0 : i32
    %c0_i32_1 = arith.constant 0 : i32
    return %c0_i32, %c0_i32_0 : i32, i32
  }
  func.func @transform_2(%arg0: i32, %arg1: i32) -> (i32, i32) {
    %c0_i32 = arith.constant 0 : i32
    %c0_i32_0 = arith.constant 0 : i32
    %c0_i32_1 = arith.constant 0 : i32
    return %c0_i32, %c0_i32_0 : i32, i32
  }
  func.func @transform_3(%arg0: i32, %arg1: i32) -> (i32, i32) {
    %c0_i32 = arith.constant 0 : i32
    %c0_i32_0 = arith.constant 0 : i32
    return %arg0, %c0_i32 : i32, i32
  }
}

</mosaic_0001>

<llo_original>
// kernel: tpu_custom_call.1
$region0: #{tpu_custom_call.1}
  #allocation0 [shape = 'u32[]', space=smem, size = 0x4, offset = 0x4, fixed_abs, tag = 'smem constant byte address 0x4 - core index']
  #allocation1 [shape = 'u32[144,128]{1,0:T(1,128)}', space=vmem, size = 0x12000, scoped, tag = 'internal scratch']
  #allocation2 [shape = 'f32[8,128]{1,0:T(8,128)}', space=vmem, size = 0x1000, scoped, tag = 'scratch operand']
  %s0 = inlined_call_operand.hbm [shape: bf16[8,24,256], index: 0, kind: input, shape index: {}]
  %s1 = inlined_call_operand.hbm [shape: bf16[256,128], index: 1, kind: input, shape index: {}]
  %s2 = inlined_call_operand.vmem [shape: f32[1,128], index: 2, kind: input, shape index: {}]
  %s3 = inlined_call_operand.hbm [shape: f32[8,128], index: 3, kind: output, shape index: {}]
  %s4 = sld [smem:[#allocation0]]
  $region38: #{tpu_custom_call.1} parent=0
    _
  %s6 = ssub.s32 1, %s4
  %s7 = scalar_select 0, %s6, %s4
  $region1: #{tpu_custom_call.1} parent=0
    #allocation3 [shape = 'u8[98304]{0}', space=vmem, size = 0x18000, scoped, tag = 'input window, operand 0, single buffered']
    #allocation4 [shape = 's32[1]{0}', space=sflag, size = 0x4, scoped, tag = 'scoped memory for tpu_custom_call.1']
    #allocation5 [shape = 's32[1]{0}', space=sflag, size = 0x4, scoped, tag = 'scoped memory for tpu_custom_call.1']
    #allocation6 [shape = 'u8[65536]{0}', space=vmem, size = 0x10000, scoped, tag = 'input window, operand 1, single buffered']
    #allocation7 [shape = 's32[1]{0}', space=sflag, size = 0x4, scoped, tag = 'scoped memory for tpu_custom_call.1']
    #allocation8 [shape = 'u8[4096]{0}', space=vmem, size = 0x1000, scoped, tag = 'output window, operand 0, single buffered']
    %8 = vsyncpa [#allocation4], 0
    %9 = vsyncpa [#allocation7], 0
    %10 = vsyncpa [#allocation5], 0
    // Predicated region
    $region2: #{tpu_custom_call.1} parent=1 // pred_check
      _
    $region3: #{tpu_custom_call.1} parent=1 // pred_check_branch
      %12 = sbr.rel (0) target = $region5
    $region4: #{tpu_custom_call.1} parent=1 // pred_region
      %s14 = ssub.s32 3072, 3072
      %15 = vsyncadd [#allocation4], %s14
      %s16 = sshll.u32 [#allocation3], 4
      %s17 = int_to_ptr.vmem [resolvable:$true] %s16
      %22 = dma.hbm_to_vmem [thread:$0]  %s0, 3072, %s17, [#allocation4], 128, 128, 8
    $region5: #{tpu_custom_call.1} parent=1 // pred_fallthru
      _
    // Predicated region
    $region6: #{tpu_custom_call.1} parent=1 // pred_check
      _
    $region7: #{tpu_custom_call.1} parent=1 // pred_check_branch
      %24 = sbr.rel (0) target = $region9
    $region8: #{tpu_custom_call.1} parent=1 // pred_region
      %s26 = ssub.s32 2048, 2048
      %27 = vsyncadd [#allocation7], %s26
      %s28 = sshll.u32 [#allocation6], 4
      %s29 = int_to_ptr.vmem [resolvable:$true] %s28
      %34 = dma.hbm_to_vmem [thread:$0]  %s1, 2048, %s29, [#allocation7], 64, 64, 4
    $region9: #{tpu_custom_call.1} parent=1 // pred_fallthru
      _
    // Predicated region
    $region10: #{tpu_custom_call.1} parent=1 // pred_check
      _
    $region11: #{tpu_custom_call.1} parent=1 // pred_check_branch
      %36 = sbr.rel (0) target = $region13
    $region12: #{tpu_custom_call.1} parent=1 // pred_region
      _
    $region13: #{tpu_custom_call.1} parent=1 // pred_fallthru
      _
    // Predicated region
    $region14: #{tpu_custom_call.1} parent=1 // pred_check
      _
    $region15: #{tpu_custom_call.1} parent=1 // pred_check_branch
      %38 = sbr.rel (0) target = $region17
    $region16: #{tpu_custom_call.1} parent=1 // pred_region
      %39 = dma.done [#allocation4], 3072
    $region17: #{tpu_custom_call.1} parent=1 // pred_fallthru
      _
    // Predicated region
    $region18: #{tpu_custom_call.1} parent=1 // pred_check
      _
    $region19: #{tpu_custom_call.1} parent=1 // pred_check_branch
      %41 = sbr.rel (0) target = $region21
    $region20: #{tpu_custom_call.1} parent=1 // pred_region
      %42 = dma.done [#allocation7], 2048
    $region21: #{tpu_custom_call.1} parent=1 // pred_fallthru
      _
    %p44 = scmp.eq.s32.totalorder 0, 0
    // Predicated region
    $region22: #{tpu_custom_call.1} parent=1 // pred_check
      %p45 = pneg %p44
    $region23: #{tpu_custom_call.1} parent=1 // pred_check_branch
      %47 = sbr.rel (%p45) target = $region25
    $region24: #{tpu_custom_call.1} parent=1 // pred_region
      %48 = vst [vmem:[#allocation2] sm:$0xff] -inf
    $region25: #{tpu_custom_call.1} parent=1 // pred_fallthru
      _
    %v49 = vld [vmem:[#allocation3] sm:$0xff]
    %v50 = vld [vmem:[#allocation3 + $0x8] sm:$0xff]
    %v51 = vld [vmem:[#allocation3 + $0x10] sm:$0xff]
    %v52 = vld [vmem:[#allocation3 + $0x18] sm:$0xff]
    %v53 = vld [vmem:[#allocation3 + $0x20] sm:$0xff]
    %v54 = vld [vmem:[#allocation3 + $0x28] sm:$0xff]
    %v55 = vld [vmem:[#allocation3 + $0x30] sm:$0xff]
    %v56 = vld [vmem:[#allocation3 + $0x38] sm:$0xff]
    %v57 = vld [vmem:[#allocation3 + $0x40] sm:$0xff]
    %v58 = vld [vmem:[#allocation3 + $0x48] sm:$0xff]
    %v59 = vld [vmem:[#allocation3 + $0x50] sm:$0xff]
    %v60 = vld [vmem:[#allocation3 + $0x58] sm:$0xff]
    %v61 = vld [vmem:[#allocation3 + $0x60] sm:$0xff]
    %v62 = vld [vmem:[#allocation3 + $0x68] sm:$0xff]
    %v63 = vld [vmem:[#allocation3 + $0x70] sm:$0xff]
    %v64 = vld [vmem:[#allocation3 + $0x78] sm:$0xff]
    %v65 = vld [vmem:[#allocation3 + $0x80] sm:$0xff]
    %v66 = vld [vmem:[#allocation3 + $0x88] sm:$0xff]
    %v67 = vld [vmem:[#allocation3 + $0x90] sm:$0xff]
    %v68 = vld [vmem:[#allocation3 + $0x98] sm:$0xff]
    %v69 = vld [vmem:[#allocation3 + $0xa0] sm:$0xff]
    %v70 = vld [vmem:[#allocation3 + $0xa8] sm:$0xff]
    %v71 = vld [vmem:[#allocation3 + $0xb0] sm:$0xff]
    %v72 = vld [vmem:[#allocation3 + $0xb8] sm:$0xff]
    %v73 = vld [vmem:[#allocation6] sm:$0xf]
    %v74 = vld [vmem:[#allocation6 + $0x4] sm:$0xf]
    %v75 = vld [vmem:[#allocation6 + $0x8] sm:$0xf]
    %v76 = vld [vmem:[#allocation6 + $0xc] sm:$0xf]
    %v77 = vld [vmem:[#allocation6 + $0x10] sm:$0xf]
    %v78 = vld [vmem:[#allocation6 + $0x14] sm:$0xf]
    %v79 = vld [vmem:[#allocation6 + $0x18] sm:$0xf]
    %v80 = vld [vmem:[#allocation6 + $0x1c] sm:$0xf]
    %v81 = vld [vmem:[#allocation6 + $0x20] sm:$0xf]
    %v82 = vld [vmem:[#allocation6 + $0x24] sm:$0xf]
    %v83 = vld [vmem:[#allocation6 + $0x28] sm:$0xf]
    %v84 = vld [vmem:[#allocation6 + $0x2c] sm:$0xf]
    %v85 = vld [vmem:[#allocation6 + $0x30] sm:$0xf]
    %v86 = vld [vmem:[#allocation6 + $0x34] sm:$0xf]
    %v87 = vld [vmem:[#allocation6 + $0x38] sm:$0xf]
    %v88 = vld [vmem:[#allocation6 + $0x3c] sm:$0xf]
    %v89 = vld [vmem:[#allocation6 + $0x40] sm:$0xf]
    %v90 = vld [vmem:[#allocation6 + $0x44] sm:$0xf]
    %v91 = vld [vmem:[#allocation6 + $0x48] sm:$0xf]
    %v92 = vld [vmem:[#allocation6 + $0x4c] sm:$0xf]
    %v93 = vld [vmem:[#allocation6 + $0x50] sm:$0xf]
    %v94 = vld [vmem:[#allocation6 + $0x54] sm:$0xf]
    %v95 = vld [vmem:[#allocation6 + $0x58] sm:$0xf]
    %v96 = vld [vmem:[#allocation6 + $0x5c] sm:$0xf]
    %v97 = vld [vmem:[#allocation6 + $0x60] sm:$0xf]
    %v98 = vld [vmem:[#allocation6 + $0x64] sm:$0xf]
    %v99 = vld [vmem:[#allocation6 + $0x68] sm:$0xf]
    %v100 = vld [vmem:[#allocation6 + $0x6c] sm:$0xf]
    %v101 = vld [vmem:[#allocation6 + $0x70] sm:$0xf]
    %v102 = vld [vmem:[#allocation6 + $0x74] sm:$0xf]
    %v103 = vld [vmem:[#allocation6 + $0x78] sm:$0xf]
    %v104 = vld [vmem:[#allocation6 + $0x7c] sm:$0xf]
    %v129 = vunpack.c.l.b16 %v49
    %v130 = vunpack.c.h.b16 %v49
    %v131 = vunpack.c.l.b16 %v50
    %v132 = vunpack.c.h.b16 %v50
    %v133 = vunpack.c.l.b16 %v51
    %v134 = vunpack.c.h.b16 %v51
    %v135 = vunpack.c.l.b16 %v52
    %v136 = vunpack.c.h.b16 %v52
    %v137 = vunpack.c.l.b16 %v53
    %v138 = vunpack.c.h.b16 %v53
    %v139 = vunpack.c.l.b16 %v54
    %v140 = vunpack.c.h.b16 %v54
    %v141 = vunpack.c.l.b16 %v55
    %v142 = vunpack.c.h.b16 %v55
    %v143 = vunpack.c.l.b16 %v56
    %v144 = vunpack.c.h.b16 %v56
    %v145 = vunpack.c.l.b16 %v57
    %v146 = vunpack.c.h.b16 %v57
    %v147 = vunpack.c.l.b16 %v58
    %v148 = vunpack.c.h.b16 %v58
    %v149 = vunpack.c.l.b16 %v59
    %v150 = vunpack.c.h.b16 %v59
    %v151 = vunpack.c.l.b16 %v60
    %v152 = vunpack.c.h.b16 %v60
    %v153 = vunpack.c.l.b16 %v61
    %v154 = vunpack.c.h.b16 %v61
    %v155 = vunpack.c.l.b16 %v62
    %v156 = vunpack.c.h.b16 %v62
    %v157 = vunpack.c.l.b16 %v63
    %v158 = vunpack.c.h.b16 %v63
    %v159 = vunpack.c.l.b16 %v64
    %v160 = vunpack.c.h.b16 %v64
    %v161 = vunpack.c.l.b16 %v65
    %v162 = vunpack.c.h.b16 %v65
    %v163 = vunpack.c.l.b16 %v66
    %v164 = vunpack.c.h.b16 %v66
    %v165 = vunpack.c.l.b16 %v67
    %v166 = vunpack.c.h.b16 %v67
    %v167 = vunpack.c.l.b16 %v68
    %v168 = vunpack.c.h.b16 %v68
    %v169 = vunpack.c.l.b16 %v69
    %v170 = vunpack.c.h.b16 %v69
    %v171 = vunpack.c.l.b16 %v70
    %v172 = vunpack.c.h.b16 %v70
    %v173 = vunpack.c.l.b16 %v71
    %v174 = vunpack.c.h.b16 %v71
    %v175 = vunpack.c.l.b16 %v72
    %v176 = vunpack.c.h.b16 %v72
    %v177 = vpack.c.b16 %v131, %v129
    %v178 = vpack.c.b16 %v132, %v130
    %v179 = vpack.c.b16 %v135, %v133
    %v180 = vpack.c.b16 %v136, %v134
    %v181 = vpack.c.b16 %v139, %v137
    %v182 = vpack.c.b16 %v140, %v138
    %v183 = vpack.c.b16 %v143, %v141
    %v184 = vpack.c.b16 %v144, %v142
    %v185 = vpack.c.b16 %v147, %v145
    %v186 = vpack.c.b16 %v148, %v146
    %v187 = vpack.c.b16 %v151, %v149
    %v188 = vpack.c.b16 %v152, %v150
    %v189 = vpack.c.b16 %v155, %v153
    %v190 = vpack.c.b16 %v156, %v154
    %v191 = vpack.c.b16 %v159, %v157
    %v192 = vpack.c.b16 %v160, %v158
    %v193 = vpack.c.b16 %v163, %v161
    %v194 = vpack.c.b16 %v164, %v162
    %v195 = vpack.c.b16 %v167, %v165
    %v196 = vpack.c.b16 %v168, %v166
    %v197 = vpack.c.b16 %v171, %v169
    %v198 = vpack.c.b16 %v172, %v170
    %v199 = vpack.c.b16 %v175, %v173
    %v200 = vpack.c.b16 %v176, %v174
    %v257 = vunpack.c.l.b16 %v73
    %v258 = vunpack.c.l.b16 %v74
    %v259 = vunpack.c.l.b16 %v75
    %v260 = vunpack.c.l.b16 %v76
    %v261 = vunpack.c.l.b16 %v77
    %v262 = vunpack.c.l.b16 %v78
    %v263 = vunpack.c.l.b16 %v79
    %v264 = vunpack.c.l.b16 %v80
    %v265 = vunpack.c.l.b16 %v81
    %v266 = vunpack.c.l.b16 %v82
    %v267 = vunpack.c.l.b16 %v83
    %v268 = vunpack.c.l.b16 %v84
    %v269 = vunpack.c.l.b16 %v85
    %v270 = vunpack.c.l.b16 %v86
    %v271 = vunpack.c.l.b16 %v87
    %v272 = vunpack.c.l.b16 %v88
    %v273 = vunpack.c.l.b16 %v89
    %v274 = vunpack.c.l.b16 %v90
    %v275 = vunpack.c.l.b16 %v91
    %v276 = vunpack.c.l.b16 %v92
    %v277 = vunpack.c.l.b16 %v93
    %v278 = vunpack.c.l.b16 %v94
    %v279 = vunpack.c.l.b16 %v95
    %v280 = vunpack.c.l.b16 %v96
    %v281 = vunpack.c.l.b16 %v97
    %v282 = vunpack.c.l.b16 %v98
    %v283 = vunpack.c.l.b16 %v99
    %v284 = vunpack.c.l.b16 %v100
    %v285 = vunpack.c.l.b16 %v101
    %v286 = vunpack.c.l.b16 %v102
    %v287 = vunpack.c.l.b16 %v103
    %v288 = vunpack.c.l.b16 %v104
    %v289 = vpack.c.b16 %v258, %v257
    %v290 = vpack.c.b16 %v260, %v259
    %v291 = vpack.c.b16 %v262, %v261
    %v292 = vpack.c.b16 %v264, %v263
    %v293 = vpack.c.b16 %v266, %v265
    %v294 = vpack.c.b16 %v268, %v267
    %v295 = vpack.c.b16 %v270, %v269
    %v296 = vpack.c.b16 %v272, %v271
    %v297 = vpack.c.b16 %v274, %v273
    %v298 = vpack.c.b16 %v276, %v275
    %v299 = vpack.c.b16 %v278, %v277
    %v300 = vpack.c.b16 %v280, %v279
    %v301 = vpack.c.b16 %v282, %v281
    %v302 = vpack.c.b16 %v284, %v283
    %v303 = vpack.c.b16 %v286, %v285
    %v304 = vpack.c.b16 %v288, %v287
    %321 = vmatprep.subr.bf16.mxu0 0
    %322 = vmatpush1.bf16.msra.mxu0 %v289
    %323 = vmatprep.subr.bf16.mxu0 0
    %324 = vmatpush1.bf16.msra.mxu0 %v290
    %325 = vmatprep.subr.bf16.mxu0 0
    %326 = vmatpush1.bf16.msra.mxu0 %v291
    %327 = vmatprep.subr.bf16.mxu0 0
    %328 = vmatpush1.bf16.msra.mxu0 %v292
    %329 = vmatprep.subr.bf16.mxu0 0
    %330 = vmatpush1.bf16.msra.mxu0 %v293
    %331 = vmatprep.subr.bf16.mxu0 0
    %332 = vmatpush1.bf16.msra.mxu0 %v294
    %333 = vmatprep.subr.bf16.mxu0 0
    %334 = vmatpush1.bf16.msra.mxu0 %v295
    %335 = vmatprep.subr.bf16.mxu0 0
    %336 = vmatpush1.bf16.msra.mxu0 %v296
    %337 = vmatprep.subr.bf16.mxu0 0
    %338 = vmatpush1.bf16.msra.mxu0 %v297
    %339 = vmatprep.subr.bf16.mxu0 0
    %340 = vmatpush1.bf16.msra.mxu0 %v298
    %341 = vmatprep.subr.bf16.mxu0 0
    %342 = vmatpush1.bf16.msra.mxu0 %v299
    %343 = vmatprep.subr.bf16.mxu0 0
    %344 = vmatpush1.bf16.msra.mxu0 %v300
    %345 = vmatprep.subr.bf16.mxu0 0
    %346 = vmatpush1.bf16.msra.mxu0 %v301
    %347 = vmatprep.subr.bf16.mxu0 0
    %348 = vmatpush1.bf16.msra.mxu0 %v302
    %349 = vmatprep.subr.bf16.mxu0 0
    %350 = vmatpush1.bf16.msra.mxu0 %v303
    %351 = vmatprep.subr.bf16.mxu0 0
    %352 = vmatpush1.bf16.msra.mxu0 %v304
    %353 = vmatprep.mubr.bf16.mxu0 %v178
    %354 = vmatmul.mubr.bf16.gmra.mrb[0].mxu0 %v177
    %v355 = vpop.f32.mrb[0].mxu0
    %v356 = vadd.f32 0.0, %v355
    %v357 = vpop.f32.mrb[0].mxu0
    %v358 = vpop.f32.mrb[0].mxu0
    %v359 = vadd.f32 0.0, %v358
    %v360 = vpop.f32.mrb[0].mxu0
    %361 = vmatprep.mubr.bf16.mxu0 %v180
    %362 = vmatmul.mubr.bf16.gmra.mrb[0].mxu0 %v179
    %v363 = vpop.f32.mrb[0].mxu0
    %v364 = vadd.f32 0.0, %v363
    %v365 = vpop.f32.mrb[0].mxu0
    %v366 = vpop.f32.mrb[0].mxu0
    %v367 = vadd.f32 0.0, %v366
    %v368 = vpop.f32.mrb[0].mxu0
    %369 = vmatprep.mubr.bf16.mxu0 %v182
    %370 = vmatmul.mubr.bf16.gmra.mrb[0].mxu0 %v181
    %v371 = vpop.f32.mrb[0].mxu0
    %v372 = vadd.f32 0.0, %v371
    %v373 = vpop.f32.mrb[0].mxu0
    %v374 = vpop.f32.mrb[0].mxu0
    %v375 = vadd.f32 0.0, %v374
    %v376 = vpop.f32.mrb[0].mxu0
    %377 = vmatprep.mubr.bf16.mxu0 %v184
    %378 = vmatmul.mubr.bf16.gmra.mrb[0].mxu0 %v183
    %v379 = vpop.f32.mrb[0].mxu0
    %v380 = vadd.f32 0.0, %v379
    %v381 = vpop.f32.mrb[0].mxu0
    %v382 = vpop.f32.mrb[0].mxu0
    %v383 = vadd.f32 0.0, %v382
    %v384 = vpop.f32.mrb[0].mxu0
    %385 = vmatprep.mubr.bf16.mxu0 %v186
    %386 = vmatmul.mubr.bf16.gmra.mrb[0].mxu0 %v185
    %v387 = vpop.f32.mrb[0].mxu0
    %v388 = vadd.f32 0.0, %v387
    %v389 = vpop.f32.mrb[0].mxu0
    %v390 = vpop.f32.mrb[0].mxu0
    %v391 = vadd.f32 0.0, %v390
    %v392 = vpop.f32.mrb[0].mxu0
    %393 = vmatprep.mubr.bf16.mxu0 %v188
    %394 = vmatmul.mubr.bf16.gmra.mrb[0].mxu0 %v187
    %v395 = vpop.f32.mrb[0].mxu0
    %v396 = vadd.f32 0.0, %v395
    %v397 = vpop.f32.mrb[0].mxu0
    %v398 = vpop.f32.mrb[0].mxu0
    %v399 = vadd.f32 0.0, %v398
    %v400 = vpop.f32.mrb[0].mxu0
    %401 = vmatprep.mubr.bf16.mxu0 %v190
    %402 = vmatmul.mubr.bf16.gmra.mrb[0].mxu0 %v189
    %v403 = vpop.f32.mrb[0].mxu0
    %v404 = vadd.f32 0.0, %v403
    %v405 = vpop.f32.mrb[0].mxu0
    %v406 = vpop.f32.mrb[0].mxu0
    %v407 = vadd.f32 0.0, %v406
    %v408 = vpop.f32.mrb[0].mxu0
    %409 = vmatprep.mubr.bf16.mxu0 %v192
    %410 = vmatmul.mubr.bf16.gmra.mrb[0].mxu0 %v191
    %v411 = vpop.f32.mrb[0].mxu0
    %v412 = vadd.f32 0.0, %v411
    %v413 = vpop.f32.mrb[0].mxu0
    %v414 = vpop.f32.mrb[0].mxu0
    %v415 = vadd.f32 0.0, %v414
    %v416 = vpop.f32.mrb[0].mxu0
    %417 = vmatprep.mubr.bf16.mxu0 %v194
    %418 = vmatmul.mubr.bf16.gmra.mrb[0].mxu0 %v193
    %v419 = vpop.f32.mrb[0].mxu0
    %v420 = vadd.f32 0.0, %v419
    %v421 = vpop.f32.mrb[0].mxu0
    %v422 = vpop.f32.mrb[0].mxu0
    %v423 = vadd.f32 0.0, %v422
    %v424 = vpop.f32.mrb[0].mxu0
    %425 = vmatprep.mubr.bf16.mxu0 %v196
    %426 = vmatmul.mubr.bf16.gmra.mrb[0].mxu0 %v195
    %v427 = vpop.f32.mrb[0].mxu0
    %v428 = vadd.f32 0.0, %v427
    %v429 = vpop.f32.mrb[0].mxu0
    %v430 = vpop.f32.mrb[0].mxu0
    %v431 = vadd.f32 0.0, %v430
    %v432 = vpop.f32.mrb[0].mxu0
    %433 = vmatprep.mubr.bf16.mxu0 %v198
    %434 = vmatmul.mubr.bf16.gmra.mrb[0].mxu0 %v197
    %v435 = vpop.f32.mrb[0].mxu0
    %v436 = vadd.f32 0.0, %v435
    %v437 = vpop.f32.mrb[0].mxu0
    %v438 = vpop.f32.mrb[0].mxu0
    %v439 = vadd.f32 0.0, %v438
    %v440 = vpop.f32.mrb[0].mxu0
    %441 = vmatprep.mubr.bf16.mxu0 %v200
    %442 = vmatmul.mubr.bf16.gmra.mrb[0].mxu0 %v199
    %v443 = vpop.f32.mrb[0].mxu0
    %v444 = vadd.f32 0.0, %v443
    %v445 = vpop.f32.mrb[0].mxu0
    %v446 = vpop.f32.mrb[0].mxu0
    %v447 = vadd.f32 0.0, %v446
    %v448 = vpop.f32.mrb[0].mxu0
    %449 = vdwg.mxu0
    %s450 = smul.u32 0, 24
    %v451 = vlaneseq
    %v452 = vshrl.u32 %v451, 7
    %v453 = vadd.s32 %v452, 8
    %v454 = vadd.s32 %v452, 16
    %v455 = vstv %s450
    %v456 = vadd.s32 %v455, %v452
    %v457 = vadd.s32 %v455, %v453
    %v458 = vadd.s32 %v455, %v454
    %vm459 = vcmp.lt.s32.totalorder %v456, 17
    %vm460 = vcmp.lt.s32.totalorder %v457, 17
    %vm461 = vcmp.lt.s32.totalorder %v458, 17
    %v462 = vsel %vm459, 1, 0
    %v463 = vsel %vm460, 1, 0
    %v464 = vsel %vm461, 1, 0
    %vm465 = vcmp.eq.s32.totalorder %v462, 1
    %vm466 = vcmp.eq.s32.totalorder %v463, 1
    %vm467 = vcmp.eq.s32.totalorder %v464, 1
    %v468 = vsel %vm465, %v356, -inf
    %v469 = vsel %vm466, %v359, -inf
    %v470 = vsel %vm467, %v364, -inf
    %v471 = vsel %vm465, %v367, -inf
    %v472 = vsel %vm466, %v372, -inf
    %v473 = vsel %vm467, %v375, -inf
    %v474 = vsel %vm465, %v380, -inf
    %v475 = vsel %vm466, %v383, -inf
    %v476 = vsel %vm467, %v388, -inf
    %v477 = vsel %vm465, %v391, -inf
    %v478 = vsel %vm466, %v396, -inf
    %v479 = vsel %vm467, %v399, -inf
    %v480 = vsel %vm465, %v404, -inf
    %v481 = vsel %vm466, %v407, -inf
    %v482 = vsel %vm467, %v412, -inf
    %v483 = vsel %vm465, %v415, -inf
    %v484 = vsel %vm466, %v420, -inf
    %v485 = vsel %vm467, %v423, -inf
    %v486 = vsel %vm465, %v428, -inf
    %v487 = vsel %vm466, %v431, -inf
    %v488 = vsel %vm467, %v436, -inf
    %v489 = vsel %vm465, %v439, -inf
    %v490 = vsel %vm466, %v444, -inf
    %v491 = vsel %vm467, %v447, -inf
    %v492 = vld [vmem:[#allocation2] sm:$0xff]
    %v493 = vmax.f32 %v468, %v469
    %v494 = vmax.f32 %v493, %v470
    %v495 = vrot.slane %v494, 4
    %v496 = vmax.f32 %v494, %v495
    %v497 = vrot.slane %v496, 2
    %v498 = vmax.f32 %v496, %v497
    %v499 = vrot.slane %v498, 1
    %v500 = vmax.f32 %v498, %v499
    %v501 = vmax.f32 %v471, %v472
    %v502 = vmax.f32 %v501, %v473
    %v503 = vrot.slane %v502, 4
    %v504 = vmax.f32 %v502, %v503
    %v505 = vrot.slane %v504, 2
    %v506 = vmax.f32 %v504, %v505
    %v507 = vrot.slane %v506, 1
    %v508 = vmax.f32 %v506, %v507
    %v509 = vmax.f32 %v474, %v475
    %v510 = vmax.f32 %v509, %v476
    %v511 = vrot.slane %v510, 4
    %v512 = vmax.f32 %v510, %v511
    %v513 = vrot.slane %v512, 2
    %v514 = vmax.f32 %v512, %v513
    %v515 = vrot.slane %v514, 1
    %v516 = vmax.f32 %v514, %v515
    %v517 = vmax.f32 %v477, %v478
    %v518 = vmax.f32 %v517, %v479
    %v519 = vrot.slane %v518, 4
    %v520 = vmax.f32 %v518, %v519
    %v521 = vrot.slane %v520, 2
    %v522 = vmax.f32 %v520, %v521
    %v523 = vrot.slane %v522, 1
    %v524 = vmax.f32 %v522, %v523
    %v525 = vmax.f32 %v480, %v481
    %v526 = vmax.f32 %v525, %v482
    %v527 = vrot.slane %v526, 4
    %v528 = vmax.f32 %v526, %v527
    %v529 = vrot.slane %v528, 2
    %v530 = vmax.f32 %v528, %v529
    %v531 = vrot.slane %v530, 1
    %v532 = vmax.f32 %v530, %v531
    %v533 = vmax.f32 %v483, %v484
    %v534 = vmax.f32 %v533, %v485
    %v535 = vrot.slane %v534, 4
    %v536 = vmax.f32 %v534, %v535
    %v537 = vrot.slane %v536, 2
    %v538 = vmax.f32 %v536, %v537
    %v539 = vrot.slane %v538, 1
    %v540 = vmax.f32 %v538, %v539
    %v541 = vmax.f32 %v486, %v487
    %v542 = vmax.f32 %v541, %v488
    %v543 = vrot.slane %v542, 4
    %v544 = vmax.f32 %v542, %v543
    %v545 = vrot.slane %v544, 2
    %v546 = vmax.f32 %v544, %v545
    %v547 = vrot.slane %v546, 1
    %v548 = vmax.f32 %v546, %v547
    %v549 = vmax.f32 %v489, %v490
    %v550 = vmax.f32 %v549, %v491
    %v551 = vrot.slane %v550, 4
    %v552 = vmax.f32 %v550, %v551
    %v553 = vrot.slane %v552, 2
    %v554 = vmax.f32 %v552, %v553
    %v555 = vrot.slane %v554, 1
    %v556 = vmax.f32 %v554, %v555
    %vm565 = vcmask 1041409
    %v566 = vsel %vm565, %v508, %v500
    %vm567 = vcmask 1042434
    %v568 = vsel %vm567, %v516, %v566
    %vm569 = vcmask 1043459
    %v570 = vsel %vm569, %v524, %v568
    %vm571 = vcmask 1044484
    %v572 = vsel %vm571, %v532, %v570
    %vm573 = vcmask 1045509
    %v574 = vsel %vm573, %v540, %v572
    %vm575 = vcmask 1046534
    %v576 = vsel %vm575, %v548, %v574
    %vm577 = vcmask 1047559
    %v578 = vsel %vm577, %v556, %v576
    %v580 = vmax.f32 %v492, %v578
    %581 = vst [vmem:[#allocation2] sm:$0xff] %v580
    // Predicated region
    $region26: #{tpu_custom_call.1} parent=1 // pred_check
      %p582 = pneg %p44
    $region27: #{tpu_custom_call.1} parent=1 // pred_check_branch
      %584 = sbr.rel (%p582) target = $region29
    $region28: #{tpu_custom_call.1} parent=1 // pred_region
      %v585 = vld [vmem:[#allocation2] sm:$0xff]
      %v586 = vld [vmem:[%s2] sm:$0x1]
      %v588 = vlaneseq
      %v589 = vshrl.u32 %v588, 7
      %v590 = vsub.s32 0, %v589
      %v591 = vrot.slane %v586, %v590
      %v593 = vadd.f32 %v585, %v591
      %v594 = vmax.f32 %v593, 0.0
      %595 = vst [vmem:[#allocation8] sm:$0xff] %v594
    $region29: #{tpu_custom_call.1} parent=1 // pred_fallthru
      _
    // Predicated region
    $region30: #{tpu_custom_call.1} parent=1 // pred_check
      _
    $region31: #{tpu_custom_call.1} parent=1 // pred_check_branch
      %597 = sbr.rel (0) target = $region33
    $region32: #{tpu_custom_call.1} parent=1 // pred_region
      %s599 = ssub.s32 128, 128
      %600 = vsyncadd [#allocation5], %s599
      %s602 = sshll.u32 [#allocation8], 4
      %s603 = int_to_ptr.vmem [resolvable:$true] %s602
      %605 = dma.vmem_to_hbm [thread:$0]  %s603, 128, %s3, [#allocation5]
    $region33: #{tpu_custom_call.1} parent=1 // pred_fallthru
      _
    // Predicated region
    $region34: #{tpu_custom_call.1} parent=1 // pred_check
      _
    $region35: #{tpu_custom_call.1} parent=1 // pred_check_branch
      %607 = sbr.rel (0) target = $region37
    $region36: #{tpu_custom_call.1} parent=1 // pred_region
      %608 = dma.done [#allocation5], 128
    $region37: #{tpu_custom_call.1} parent=1 // pred_fallthru
      _
    %609 = vsyncpa [#allocation4], 1
    %610 = vsyncpa [#allocation7], 1
    %611 = vsyncpa [#allocation5], 1

</llo_original>
